<compile_context>
chip_gen: v5e
topology: v5e:2x2
jax: 0.10.0
libtpu: 0.0.40
codegen_flags: <defaults>
</compile_context>

<pallas_src>
import jax
import jax.numpy as jnp
from jax.experimental import pallas as pl
from jax.experimental.pallas import tpu as pltpu


def _pick_row_tile(H, W):
    """Smallest TH dividing H such that TH*W is a multiple of 128 (lane-dense tiles)."""
    for th in range(1, H + 1):
        if H % th == 0 and (th * W) % 128 == 0:
            return th
    return H  # fallback: whole image per step (block == full dim, still legal)


def _residual_conv3x3_kernel(x_ref, w_ref, b_ref, out_ref):
    # x_ref  : (1, Cin, H+2, W+2)   zero-padded NCHW image (resident across h steps)
    # w_ref  : (Cout, 9*Cin)        3x3 weights with the 1x1 skip folded into center tap
    # b_ref  : (Cout, 1)            combined bias (b3 + bskip)
    # out_ref: (1, Cout, TH*W)      lane-dense output tile = output rows [h*TH, h*TH+TH)
    h = pl.program_id(1)
    cin = x_ref.shape[1]
    w_out = x_ref.shape[3] - 2                      # output width W
    thw = out_ref.shape[2]
    th = thw // w_out                               # output rows per grid step

    # Rows needed for this tile: TH output rows need TH+2 padded input rows.
    r0 = pl.multiple_of(h * th, th)
    xb = x_ref[0, :, pl.ds(r0, th + 2), :]          # (Cin, TH+2, W+2)

    # im2col: 9 shifted windows stacked along the contraction axis (order matches
    # the wrapper's weight flattening: k = (dy*3 + dx)*Cin + ci).
    taps = []
    for dy in range(3):
        for dx in range(3):
            taps.append(xb[:, dy:dy + th, dx:dx + w_out].reshape(cin, th * w_out))
    patch = jnp.concatenate(taps, axis=0)           # (9*Cin, TH*W)

    # Single MXU matmul (main 3x3 conv + folded 1x1 skip), f32 accumulation.
    acc = jnp.dot(w_ref[...], patch, preferred_element_type=jnp.float32)  # (Cout, TH*W)
    out_ref[0] = (acc + b_ref[...]).astype(out_ref.dtype)


def residual_conv3x3(x_nchw, w3, b3, wskip=None, bskip=None):
    """Forward pass of ResidualConv3x3.

    x_nchw: (N, Cin, H, W); w3: (Cout, Cin, 3, 3); b3: (Cout,)
    wskip:  (Cout, Cin, 1, 1) or None (identity skip when Cin == Cout); bskip: (Cout,) or None.
    Returns (N, Cout, H, W), matching the PyTorch module.
    """
    N, Cin, H, W = x_nchw.shape
    Cout = w3.shape[0]

    # --- weight prep: fold the skip branch into the center tap (math-identical) ---
    # wmat[co, (dy*3+dx)*Cin + ci] = w3[co, ci, dy, dx]
    w_mat = jnp.transpose(w3, (0, 2, 3, 1)).reshape(Cout, 9 * Cin)
    if wskip is not None:
        skip_mat = wskip.reshape(Cout, Cin)
        b_comb = b3 + bskip
    else:
        # in_channels == out_channels: skip is the identity (output += input)
        skip_mat = jnp.eye(Cout, Cin, dtype=w_mat.dtype)
        b_comb = b3
    center = 4 * Cin  # tap (dy=1, dx=1)
    w_mat = w_mat.at[:, center:center + Cin].add(skip_mat)
    b_mat = b_comb.reshape(Cout, 1)

    # Zero-pad H and W by 1 (padding=1).  Stays in NCHW -> no transposes anywhere.
    # TODO(synk): for very large images, handle the 1-pixel border in-kernel with
    # masked edge taps to avoid this extra HBM round trip for the pad.
    x_pad = jnp.pad(x_nchw, ((0, 0), (0, 0), (1, 1), (1, 1)))

    th = _pick_row_tile(H, W)
    ht = H // th

    out_flat = pl.pallas_call(
        _residual_conv3x3_kernel,
        out_shape=jax.ShapeDtypeStruct((N, Cout, H * W), x_nchw.dtype),
        grid_spec=pltpu.PrefetchScalarGridSpec(
            num_scalar_prefetch=0,
            grid=(N, ht),
            in_specs=[
                # whole padded image per batch element; index ignores h -> fetched once per n
                pl.BlockSpec((1, Cin, H + 2, W + 2), lambda n, h: (n, 0, 0, 0)),
                pl.BlockSpec((Cout, 9 * Cin), lambda n, h: (0, 0)),
                pl.BlockSpec((Cout, 1), lambda n, h: (0, 0)),
            ],
            # lane-dense output tiles: last dim th*W (multiple of 128 when possible)
            out_specs=pl.BlockSpec((1, Cout, th * W), lambda n, h: (n, 0, h)),
        ),
        compiler_params=pltpu.CompilerParams(
            dimension_semantics=("parallel", "parallel")),
    )(x_pad, w_mat, b_mat)

    # (N, Cout, H*W) -> (N, Cout, H, W): free row-major reshape, no transpose.
    return out_flat.reshape(N, Cout, H, W)


def _reference(x_nchw, w3, b3, wskip, bskip):
    """Pure-JAX reference using lax.conv_general_dilated (NCHW, like PyTorch)."""
    main = jax.lax.conv_general_dilated(
        x_nchw, w3, window_strides=(1, 1), padding=((1, 1), (1, 1)),
        dimension_numbers=("NCHW", "OIHW", "NCHW"))
    main = main + b3[None, :, None, None]
    skip = jax.lax.conv_general_dilated(
        x_nchw, wskip, window_strides=(1, 1), padding=((0, 0), (0, 0)),
        dimension_numbers=("NCHW", "OIHW", "NCHW"))
    skip = skip + bskip[None, :, None, None]
    return main + skip


if __name__ == "__main__":
    N, Cin, Cout, H, W = 2, 4, 8, 16, 16

    key = jax.random.PRNGKey(0)
    kx, kw3, kb3, kws, kbs = jax.random.split(key, 5)

    x = jax.random.normal(kx, (N, Cin, H, W), dtype=jnp.float32)
    w3 = jax.random.normal(kw3, (Cout, Cin, 3, 3), dtype=jnp.float32) * 0.1
    b3 = jax.random.normal(kb3, (Cout,), dtype=jnp.float32) * 0.1
    wskip = jax.random.normal(kws, (Cout, Cin, 1, 1), dtype=jnp.float32) * 0.1
    bskip = jax.random.normal(kbs, (Cout,), dtype=jnp.float32) * 0.1

    fwd = jax.jit(residual_conv3x3)
    out = jax.block_until_ready(fwd(x, w3, b3, wskip, bskip))

    ref = _reference(x, w3, b3, wskip, bskip)
    assert out.shape == (N, Cout, H, W)
    assert jnp.allclose(out, ref, atol=1e-4, rtol=1e-4), float(jnp.max(jnp.abs(out - ref)))

    print("KERNEL_OK")
</pallas_src>

<mosaic_0001>
module attributes {stable_mosaic.version = 11 : i64} {
  func.func @_residual_conv3x3_kernel(%arg0: i32, %arg1: i32, %arg2: memref<1x4x18x18xf32, #tpu.memory_space<vmem>>, %arg3: memref<8x36xf32, #tpu.memory_space<vmem>>, %arg4: memref<8x1xf32, #tpu.memory_space<vmem>>, %arg5: memref<1x8x128xf32, #tpu.memory_space<vmem>>) attributes {dimension_semantics = [#tpu.dimension_semantics<parallel>, #tpu.dimension_semantics<parallel>], iteration_bounds = array<i64: 2, 2>, scalar_prefetch = 0 : i64, scratch_operands = 0 : i64, tpu.core_type = #tpu.core_type<tc>, window_params = [{transform_indices = @transform_0, window_bounds = array<i64: 1, 4, 18, 18>}, {pipeline_mode = #tpu.pipeline_mode<synchronous>, transform_indices = @transform_1, window_bounds = array<i64: 8, 36>}, {pipeline_mode = #tpu.pipeline_mode<synchronous>, transform_indices = @transform_2, window_bounds = array<i64: 8, 1>}, {transform_indices = @transform_3, window_bounds = array<i64: 1, 8, 128>}]} {
    %c8_i32 = arith.constant 8 : i32
    %0 = arith.muli %arg1, %c8_i32 : i32
    %1 = tpu.assume_multiple %0, 8 : i32
    %c0 = arith.constant 0 : index
    %c0_0 = arith.constant 0 : index
    %2 = arith.index_cast %1 : i32 to index
    %c0_1 = arith.constant 0 : index
    %3 = vector.load %arg2[%c0, %c0_0, %2, %c0_1] : memref<1x4x18x18xf32, #tpu.memory_space<vmem>>, vector<1x4x10x18xf32>
    %4 = vector.shape_cast %3 : vector<1x4x10x18xf32> to vector<4x10x18xf32>
    %5 = vector.extract_strided_slice %4 {offsets = [0, 0, 0], sizes = [4, 8, 16], strides = [1, 1, 1]} : vector<4x10x18xf32> to vector<4x8x16xf32>
    %6 = vector.shape_cast %5 : vector<4x8x16xf32> to vector<4x128xf32>
    %7 = vector.extract_strided_slice %4 {offsets = [0, 0, 1], sizes = [4, 8, 16], strides = [1, 1, 1]} : vector<4x10x18xf32> to vector<4x8x16xf32>
    %8 = vector.shape_cast %7 : vector<4x8x16xf32> to vector<4x128xf32>
    %9 = vector.extract_strided_slice %4 {offsets = [0, 0, 2], sizes = [4, 8, 16], strides = [1, 1, 1]} : vector<4x10x18xf32> to vector<4x8x16xf32>
    %10 = vector.shape_cast %9 : vector<4x8x16xf32> to vector<4x128xf32>
    %11 = vector.extract_strided_slice %4 {offsets = [0, 1, 0], sizes = [4, 8, 16], strides = [1, 1, 1]} : vector<4x10x18xf32> to vector<4x8x16xf32>
    %12 = vector.shape_cast %11 : vector<4x8x16xf32> to vector<4x128xf32>
    %13 = vector.extract_strided_slice %4 {offsets = [0, 1, 1], sizes = [4, 8, 16], strides = [1, 1, 1]} : vector<4x10x18xf32> to vector<4x8x16xf32>
    %14 = vector.shape_cast %13 : vector<4x8x16xf32> to vector<4x128xf32>
    %15 = vector.extract_strided_slice %4 {offsets = [0, 1, 2], sizes = [4, 8, 16], strides = [1, 1, 1]} : vector<4x10x18xf32> to vector<4x8x16xf32>
    %16 = vector.shape_cast %15 : vector<4x8x16xf32> to vector<4x128xf32>
    %17 = vector.extract_strided_slice %4 {offsets = [0, 2, 0], sizes = [4, 8, 16], strides = [1, 1, 1]} : vector<4x10x18xf32> to vector<4x8x16xf32>
    %18 = vector.shape_cast %17 : vector<4x8x16xf32> to vector<4x128xf32>
    %19 = vector.extract_strided_slice %4 {offsets = [0, 2, 1], sizes = [4, 8, 16], strides = [1, 1, 1]} : vector<4x10x18xf32> to vector<4x8x16xf32>
    %20 = vector.shape_cast %19 : vector<4x8x16xf32> to vector<4x128xf32>
    %21 = vector.extract_strided_slice %4 {offsets = [0, 2, 2], sizes = [4, 8, 16], strides = [1, 1, 1]} : vector<4x10x18xf32> to vector<4x8x16xf32>
    %22 = vector.shape_cast %21 : vector<4x8x16xf32> to vector<4x128xf32>
    %23 = tpu.concatenate %6, %8, %10, %12, %14, %16, %18, %20, %22 in 0 : vector<4x128xf32>, vector<4x128xf32>, vector<4x128xf32>, vector<4x128xf32>, vector<4x128xf32>, vector<4x128xf32>, vector<4x128xf32>, vector<4x128xf32>, vector<4x128xf32> -> vector<36x128xf32>
    %c0_2 = arith.constant 0 : index
    %c0_3 = arith.constant 0 : index
    %24 = vector.load %arg3[%c0_2, %c0_3] : memref<8x36xf32, #tpu.memory_space<vmem>>, vector<8x36xf32>
    %cst = arith.constant dense<0.000000e+00> : vector<8x128xf32>
    %25 = tpu.matmul %24, %23, %cst {dimension_numbers = #tpu.dot_dimension_numbers<[1], [0], [0], [1], [0, 0, 1, 1], [], []>} : vector<8x36xf32>, vector<36x128xf32>, vector<8x128xf32> -> vector<8x128xf32>
    %c0_4 = arith.constant 0 : index
    %c0_5 = arith.constant 0 : index
    %26 = vector.load %arg4[%c0_4, %c0_5] : memref<8x1xf32, #tpu.memory_space<vmem>>, vector<8x1xf32>
    %27 = vector.broadcast %26 : vector<8x1xf32> to vector<8x128xf32>
    %28 = arith.addf %25, %27 : vector<8x128xf32>
    %c0_6 = arith.constant 0 : index
    %c0_7 = arith.constant 0 : index
    %c0_8 = arith.constant 0 : index
    %29 = vector.load %arg5[%c0_6, %c0_7, %c0_8] : memref<1x8x128xf32, #tpu.memory_space<vmem>>, vector<1x8x128xf32>
    %30 = vector.shape_cast %29 : vector<1x8x128xf32> to vector<8x128xf32>
    %31 = vector.shape_cast %28 : vector<8x128xf32> to vector<1x8x128xf32>
    tpu.vector_store %arg5[%c0_6, %c0_7, %c0_8], %31 {strides = array<i32>} : memref<1x8x128xf32, #tpu.memory_space<vmem>>, vector<1x8x128xf32>,
    return
  }
  func.func @transform_0(%arg0: i32, %arg1: i32) -> (i32, i32, i32, i32) {
    %c0_i32 = arith.constant 0 : i32
    %c0_i32_0 = arith.constant 0 : i32
    %c0_i32_1 = arith.constant 0 : i32
    %c0_i32_2 = arith.constant 0 : i32
    return %arg0, %c0_i32, %c0_i32_0, %c0_i32_1 : i32, i32, i32, i32
  }
  func.func @transform_1(%arg0: i32, %arg1: i32) -> (i32, i32) {
    %c0_i32 = arith.constant 0 : i32
    %c0_i32_0 = arith.constant 0 : i32
    %c0_i32_1 = arith.constant 0 : i32
    return %c0_i32, %c0_i32_0 : i32, i32
  }
  func.func @transform_2(%arg0: i32, %arg1: i32) -> (i32, i32) {
    %c0_i32 = arith.constant 0 : i32
    %c0_i32_0 = arith.constant 0 : i32
    %c0_i32_1 = arith.constant 0 : i32
    return %c0_i32, %c0_i32_0 : i32, i32
  }
  func.func @transform_3(%arg0: i32, %arg1: i32) -> (i32, i32, i32) {
    %c0_i32 = arith.constant 0 : i32
    %c0_i32_0 = arith.constant 0 : i32
    return %arg0, %c0_i32, %arg1 : i32, i32, i32
  }
}

</mosaic_0001>

<llo_original>
// kernel: residual_conv3x3.1
$region0: #{residual_conv3x3.1}
  #allocation0 [shape = 'u32[]', space=smem, size = 0x4, offset = 0x4, fixed_abs, tag = 'smem constant byte address 0x4 - core index']
  #allocation1 [shape = 'u32[72,128]{1,0:T(1,128)}', space=vmem, size = 0x9000, scoped, tag = 'internal scratch']
  %s0 = inlined_call_operand.vmem [shape: f32[2,4,18,18], index: 0, kind: input, shape index: {}]
  %s1 = inlined_call_operand.vmem [shape: f32[8,36], index: 1, kind: input, shape index: {}]
  %s2 = inlined_call_operand.vmem [shape: f32[8,1], index: 2, kind: input, shape index: {}]
  %s3 = inlined_call_operand.vmem [shape: f32[2,8,256], index: 3, kind: output, shape index: {}]
  %s4 = sld [smem:[#allocation0]]
  $region45: #{residual_conv3x3.1} parent=0
    _
  %s6 = ssub.s32 1, %s4
  %s7 = scalar_select 0, %s6, %s4
  loop: start=0, step=1, limit=6
  $region2: #{residual_conv3x3.1} parent=0 // loop_pre_header
    _
  $region3: #{residual_conv3x3.1} parent=0 // loop_header
    %s9 = sphi 0, %s13
    %p10 = scmp.ge.s32.totalorder %s9, 6
    %s16 = sphi 0, %s28
    %s17 = sphi 0, %s24
    %s18 = sphi 0, %s16
    %s19 = sphi 0, %s17
    %s20 = sphi 0, %s18
    %s21 = sphi 0, %s19
    %s31 = sphi 0, %s33
    %s34 = sphi 0, %s31
    %s35 = sphi 0, %s34
    %s51 = sphi 0, %s35
    %s55 = sphi 0, %s55
    %s57 = sphi 0, %s55
    %s58 = sphi 0, %s57
    %s72 = sphi 0, %s58
    %s76 = sphi 0, %s76
    %s78 = sphi 0, %s76
    %s79 = sphi 0, %s78
    %s93 = sphi 0, %s79
    %s101 = sphi 0, %s103
    %s104 = sphi 0, %s101
    %s105 = sphi 0, %s104
    %s121 = sphi 0, %s105
  $region4: #{residual_conv3x3.1} parent=0 // loop_header_branch
    %12 = sbr.rel (%p10) target = $region8
  $region5: #{residual_conv3x3.1} parent=0 // loop_body
    %s14 = ssub.s32 %s9, 1
    %s15 = ssub.s32 %s9, 2
    %s22 = sadd.s32 1, %s17
    %p23 = scmp.ge.s32.totalorder %s22, 2
    %s24 = scalar_select %p23, 0, %s22
    %s25 = sadd.s32 1, %s16
    %s26 = scalar_select %p23, %s25, %s16
    %p27 = scmp.ge.s32.totalorder %s26, 2
    %s28 = scalar_select %p27, 0, %s26
    %s29 = ssub.s32 %s16, %s28
    %p30 = scmp.eq.s32.totalorder %s29, 0
    %s32 = sadd.s32 %s31, 1
    %s33 = scalar_select %p30, %s31, %s32
    %p36 = pneg %p30
    %p37 = scmp.eq.s32.totalorder %s9, 3
    %p38 = por %p36, %p37
    %p39 = scmp.ne.s32.totalorder %s31, %s34
    %p40 = scmp.eq.s32.totalorder %s9, 0
    %p41 = por %p39, %p40
    %p42 = scmp.ne.s32.totalorder %s31, %s34
    %p43 = scmp.eq.s32.totalorder %s14, 3
    %p44 = por %p42, %p43
    %p45 = scmp.ne.s32.totalorder %s34, %s35
    %p46 = scmp.eq.s32.totalorder %s14, 0
    %p47 = por %p45, %p46
    %p48 = scmp.ne.s32.totalorder %s34, %s35
    %p49 = scmp.eq.s32.totalorder %s15, 3
    %p50 = por %p48, %p49
    %p52 = scmp.ne.s32.totalorder %s35, %s51
    %p53 = scmp.eq.s32.totalorder %s15, 0
    %p54 = por %p52, %p53
    %s56 = sadd.s32 %s55, 1
    %p59 = scmp.eq.s32.totalorder %s9, 3
    %p60 = scmp.ne.s32.totalorder %s55, %s57
    %p61 = scmp.eq.s32.totalorder %s9, 0
    %p62 = por %p60, %p61
    %p63 = scmp.ne.s32.totalorder %s55, %s57
    %p64 = scmp.eq.s32.totalorder %s14, 3
    %p65 = por %p63, %p64
    %p66 = scmp.ne.s32.totalorder %s57, %s58
    %p67 = scmp.eq.s32.totalorder %s14, 0
    %p68 = por %p66, %p67
    %p69 = scmp.ne.s32.totalorder %s57, %s58
    %p70 = scmp.eq.s32.totalorder %s15, 3
    %p71 = por %p69, %p70
    %p73 = scmp.ne.s32.totalorder %s58, %s72
    %p74 = scmp.eq.s32.totalorder %s15, 0
    %p75 = por %p73, %p74
    %s77 = sadd.s32 %s76, 1
    %p80 = scmp.eq.s32.totalorder %s9, 3
    %p81 = scmp.ne.s32.totalorder %s76, %s78
    %p82 = scmp.eq.s32.totalorder %s9, 0
    %p83 = por %p81, %p82
    %p84 = scmp.ne.s32.totalorder %s76, %s78
    %p85 = scmp.eq.s32.totalorder %s14, 3
    %p86 = por %p84, %p85
    %p87 = scmp.ne.s32.totalorder %s78, %s79
    %p88 = scmp.eq.s32.totalorder %s14, 0
    %p89 = por %p87, %p88
    %p90 = scmp.ne.s32.totalorder %s78, %s79
    %p91 = scmp.eq.s32.totalorder %s15, 3
    %p92 = por %p90, %p91
    %p94 = scmp.ne.s32.totalorder %s79, %s93
    %p95 = scmp.eq.s32.totalorder %s15, 0
    %p96 = por %p94, %p95
    %s97 = ssub.s32 %s16, %s28
    %s98 = ssub.s32 %s17, %s24
    %s99 = sor.u32 %s97, %s98
    %p100 = scmp.eq.s32.totalorder %s99, 0
    %s102 = sadd.s32 %s101, 1
    %s103 = scalar_select %p100, %s101, %s102
    %p106 = pneg %p100
    %p107 = scmp.eq.s32.totalorder %s9, 3
    %p108 = por %p106, %p107
    %p109 = scmp.ne.s32.totalorder %s101, %s104
    %p110 = scmp.eq.s32.totalorder %s9, 0
    %p111 = por %p109, %p110
    %p112 = scmp.ne.s32.totalorder %s101, %s104
    %p113 = scmp.eq.s32.totalorder %s14, 3
    %p114 = por %p112, %p113
    %p115 = scmp.ne.s32.totalorder %s104, %s105
    %p116 = scmp.eq.s32.totalorder %s14, 0
    %p117 = por %p115, %p116
    %p118 = scmp.ne.s32.totalorder %s104, %s105
    %p119 = scmp.eq.s32.totalorder %s15, 3
    %p120 = por %p118, %p119
    %p122 = scmp.ne.s32.totalorder %s105, %s121
    %p123 = scmp.eq.s32.totalorder %s15, 0
    %p124 = por %p122, %p123
    %p125 = scmp.le.s32.totalorder 1, %s9
    %p126 = scmp.lt.s32.totalorder %s9, 5
    %p127 = pnand %p125, %p126
    %p128 = pneg %p127
    // Predicated region
    $region9: #{residual_conv3x3.1} parent=5 // pred_check
      _
    $region10: #{residual_conv3x3.1} parent=5 // pred_check_branch
      %130 = sbr.rel (%p127) target = $region12
    $region11: #{residual_conv3x3.1} parent=5 // pred_region
      %s131 = ssub.s32 %s9, 1
      // Predicated region
      $region13: #{residual_conv3x3.1} parent=11 // pred_check
        %p132 = pneg %p68
      $region14: #{residual_conv3x3.1} parent=11 // pred_check_branch
        %134 = sbr.rel (%p132) target = $region16
      $region15: #{residual_conv3x3.1} parent=11 // pred_region
        _
      $region16: #{residual_conv3x3.1} parent=11 // pred_fallthru
        _
      // Predicated region
      $region17: #{residual_conv3x3.1} parent=11 // pred_check
        %p135 = pneg %p89
      $region18: #{residual_conv3x3.1} parent=11 // pred_check_branch
        %137 = sbr.rel (%p135) target = $region20
      $region19: #{residual_conv3x3.1} parent=11 // pred_region
        _
      $region20: #{residual_conv3x3.1} parent=11 // pred_fallthru
        _
    $region12: #{residual_conv3x3.1} parent=5 // pred_fallthru
      _
    %p138 = scmp.lt.s32.totalorder %s9, 4
    // Predicated region
    $region21: #{residual_conv3x3.1} parent=5 // pred_check
      %p139 = pneg %p138
    $region22: #{residual_conv3x3.1} parent=5 // pred_check_branch
      %141 = sbr.rel (%p139) target = $region24
    $region23: #{residual_conv3x3.1} parent=5 // pred_region
      // Predicated region
      $region25: #{residual_conv3x3.1} parent=23 // pred_check
        %p142 = pneg %p41
      $region26: #{residual_conv3x3.1} parent=23 // pred_check_branch
        %144 = sbr.rel (%p142) target = $region28
      $region27: #{residual_conv3x3.1} parent=23 // pred_region
        %p145 = scmp.lt.s32.totalorder %s16, 1
        %s146 = scalar_select %p145, %s16, 1
        %s147 = smul.addr %s146, 12
        %s148 = smul.addr %s147, 8
        %s149 = scalar_lea.vmem %s0, %s148
      $region28: #{residual_conv3x3.1} parent=23 // pred_fallthru
        _
    $region24: #{residual_conv3x3.1} parent=5 // pred_fallthru
      _
    %p150 = scmp.le.s32.totalorder 1, %s9
    %p151 = scmp.lt.s32.totalorder %s9, 5
    %p152 = pnand %p150, %p151
    %p153 = pneg %p152
    // Predicated region
    $region29: #{residual_conv3x3.1} parent=5 // pred_check
      _
    $region30: #{residual_conv3x3.1} parent=5 // pred_check_branch
      %155 = sbr.rel (%p152) target = $region32
    $region31: #{residual_conv3x3.1} parent=5 // pred_region
      %s156 = ssub.s32 %s9, 1
      %p157 = scmp.lt.s32.totalorder %s18, 1
      %s158 = scalar_select %p157, %s18, 1
      %s159 = smul.addr %s158, 12
      %s160 = smul.addr %s159, 8
      %s161 = scalar_lea.vmem %s0, %s160
      %p162 = pneg %p47
      %p163 = pneg %p44
      %p164 = pneg %p68
      %p165 = pneg %p65
      %p166 = pneg %p89
      %p167 = pneg %p86
      %p168 = pneg %p117
      %p169 = pneg %p114
      %p170 = scmp.lt.s32.totalorder %s18, 1
      %s171 = scalar_select %p170, %s18, 1
      %p172 = scmp.lt.s32.totalorder %s19, 1
      %s173 = scalar_select %p172, %s19, 1
      %s174 = smul.addr %s171, 2
      %s175 = sadd.s32 %s173, %s174
      %s176 = smul.addr %s175, 8
      %s177 = scalar_lea.vmem %s3, %s176
      %p178 = scmp.lt.s32.totalorder %s18, 1
      %s179 = scalar_select %p178, %s18, 1
      %s180 = smul.addr %s179, 12
      %s181 = smul.addr %s180, 8
      %s182 = scalar_lea.vmem %s0, %s181
      %p183 = scmp.lt.s32.totalorder %s18, 1
      %s184 = scalar_select %p183, %s18, 1
      %p185 = scmp.lt.s32.totalorder %s19, 1
      %s186 = scalar_select %p185, %s19, 1
      %s187 = smul.addr %s184, 2
      %s188 = sadd.s32 %s186, %s187
      %s189 = smul.addr %s188, 8
      %s190 = scalar_lea.vmem %s3, %s189
      %s191 = smul.u32 %s19, 8
      %s192 = scalar_lea.vmem %s182, %s191
      %v193 = vld [vmem:[%s192] sm:$0xff]
      %v194 = vld [vmem:[%s192 + $0x8] sm:$0x3]
      %v195 = vld [vmem:[%s192 + $0x18] sm:$0xff]
      %v196 = vld [vmem:[%s192 + $0x20] sm:$0x3]
      %v197 = vld [vmem:[%s192 + $0x30] sm:$0xff]
      %v198 = vld [vmem:[%s192 + $0x38] sm:$0x3]
      %v199 = vld [vmem:[%s192 + $0x48] sm:$0xff]
      %v200 = vld [vmem:[%s192 + $0x50] sm:$0x3]
      %v201 = vrot.slane %v197, 4
      %vm202 = vcmask 1047556
      %v203 = vsel %vm202, %v201, %v193
      %v204 = vrot.slane %v193, 4
      %v205 = vsel %vm202, %v197, %v204
      %v207 = vunpack.c.l.s4 1983009808
      %v208 = vunpack.c.0.s8 %v207
      %v209 = vperm.slane %v203, %v208
      %v211 = vunpack.c.l.s4 1983009808
      %v212 = vunpack.c.0.s8 %v211
      %v213 = vperm.slane %v205, %v212
      %v214 = vrot.slane %v199, 4
      %v215 = vsel %vm202, %v214, %v195
      %v216 = vrot.slane %v195, 4
      %v217 = vsel %vm202, %v199, %v216
      %v219 = vunpack.c.l.s4 1983009808
      %v220 = vunpack.c.0.s8 %v219
      %v221 = vperm.slane %v215, %v220
      %v223 = vunpack.c.l.s4 1983009808
      %v224 = vunpack.c.0.s8 %v223
      %v225 = vperm.slane %v217, %v224
      %v226 = vrot.slane %v221, 4
      %v227 = vsel %vm202, %v226, %v209
      %v228 = vrot.slane %v209, 4
      %v229 = vsel %vm202, %v221, %v228
      %v231 = vunpack.c.l.s4 1934713408
      %v232 = vunpack.c.0.s8 %v231
      %v233 = vperm.slane %v227, %v232
      %v235 = vunpack.c.l.s4 1934713408
      %v236 = vunpack.c.0.s8 %v235
      %v237 = vperm.slane %v229, %v236
      %v238 = vrot.slane %v225, 4
      %v239 = vsel %vm202, %v238, %v213
      %v240 = vrot.slane %v213, 4
      %v241 = vsel %vm202, %v225, %v240
      %v243 = vunpack.c.l.s4 1934713408
      %v244 = vunpack.c.0.s8 %v243
      %v245 = vperm.slane %v239, %v244
      %v247 = vunpack.c.l.s4 1934713408
      %v248 = vunpack.c.0.s8 %v247
      %v249 = vperm.slane %v241, %v248
      %v250 = vrot.slane %v233, 4
      %v251 = vsel %vm202, 0.0, %v250
      %v252 = vrot.slane %v237, 4
      %v253 = vsel %vm202, 0.0, %v252
      %v254 = vrot.slane %v245, 4
      %v255 = vsel %vm202, 0.0, %v254
      %v256 = vrot.slane %v249, 4
      %v257 = vsel %vm202, 0.0, %v256
      %259 = vrot.lane.b32.xlu0 %v251, 16
      %v260 = vpop.permute.xlu0 %259
      %263 = vrot.lane.b32.xlu0 %v237, 32
      %v264 = vpop.permute.xlu0 %263
      %267 = vrot.lane.b32.xlu0 %v253, 48
      %v268 = vpop.permute.xlu0 %267
      %271 = vrot.lane.b32.xlu0 %v245, 64
      %v272 = vpop.permute.xlu0 %271
      %275 = vrot.lane.b32.xlu0 %v255, 80
      %v276 = vpop.permute.xlu0 %275
      %279 = vrot.lane.b32.xlu0 %v249, 96
      %v280 = vpop.permute.xlu0 %279
      %283 = vrot.lane.b32.xlu0 %v257, 112
      %v284 = vpop.permute.xlu0 %283
      %vm286 = vcmask 130048
      %v287 = vsel %vm286, %v233, %v260
      %vm288 = vcmask 261120
      %v289 = vsel %vm288, %v287, %v264
      %vm290 = vcmask 392192
      %v291 = vsel %vm290, %v289, %v268
      %vm292 = vcmask 523264
      %v293 = vsel %vm292, %v291, %v272
      %vm294 = vcmask 654336
      %v295 = vsel %vm294, %v293, %v276
      %vm296 = vcmask 785408
      %v297 = vsel %vm296, %v295, %v280
      %vm298 = vcmask 916480
      %v299 = vsel %vm298, %v297, %v284
      %304 = vrot.lane.b32.xlu0 %v193, 127
      %v305 = vpop.permute.xlu0 %304
      %306 = vrot.lane.b32.xlu0 %v195, 127
      %v307 = vpop.permute.xlu0 %306
      %308 = vrot.lane.b32.xlu0 %v197, 127
      %v309 = vpop.permute.xlu0 %308
      %310 = vrot.lane.b32.xlu0 %v199, 127
      %v311 = vpop.permute.xlu0 %310
      %v316 = vrot.slane %v309, 4
      %v317 = vsel %vm202, %v316, %v305
      %v318 = vrot.slane %v305, 4
      %v319 = vsel %vm202, %v309, %v318
      %v321 = vunpack.c.l.s4 1983009808
      %v322 = vunpack.c.0.s8 %v321
      %v323 = vperm.slane %v317, %v322
      %v325 = vunpack.c.l.s4 1983009808
      %v326 = vunpack.c.0.s8 %v325
      %v327 = vperm.slane %v319, %v326
      %v328 = vrot.slane %v311, 4
      %v329 = vsel %vm202, %v328, %v307
      %v330 = vrot.slane %v307, 4
      %v331 = vsel %vm202, %v311, %v330
      %v333 = vunpack.c.l.s4 1983009808
      %v334 = vunpack.c.0.s8 %v333
      %v335 = vperm.slane %v329, %v334
      %v337 = vunpack.c.l.s4 1983009808
      %v338 = vunpack.c.0.s8 %v337
      %v339 = vperm.slane %v331, %v338
      %v340 = vrot.slane %v335, 4
      %v341 = vsel %vm202, %v340, %v323
      %v342 = vrot.slane %v323, 4
      %v343 = vsel %vm202, %v335, %v342
      %v345 = vunpack.c.l.s4 1934713408
      %v346 = vunpack.c.0.s8 %v345
      %v347 = vperm.slane %v341, %v346
      %v349 = vunpack.c.l.s4 1934713408
      %v350 = vunpack.c.0.s8 %v349
      %v351 = vperm.slane %v343, %v350
      %v352 = vrot.slane %v339, 4
      %v353 = vsel %vm202, %v352, %v327
      %v354 = vrot.slane %v327, 4
      %v355 = vsel %vm202, %v339, %v354
      %v357 = vunpack.c.l.s4 1934713408
      %v358 = vunpack.c.0.s8 %v357
      %v359 = vperm.slane %v353, %v358
      %v361 = vunpack.c.l.s4 1934713408
      %v362 = vunpack.c.0.s8 %v361
      %v363 = vperm.slane %v355, %v362
      %v364 = vrot.slane %v347, 4
      %v365 = vsel %vm202, 0.0, %v364
      %v366 = vrot.slane %v351, 4
      %v367 = vsel %vm202, 0.0, %v366
      %v368 = vrot.slane %v359, 4
      %v369 = vsel %vm202, 0.0, %v368
      %v370 = vrot.slane %v363, 4
      %v371 = vsel %vm202, 0.0, %v370
      %373 = vrot.lane.b32.xlu0 %v365, 16
      %v374 = vpop.permute.xlu0 %373
      %377 = vrot.lane.b32.xlu0 %v351, 32
      %v378 = vpop.permute.xlu0 %377
      %381 = vrot.lane.b32.xlu0 %v367, 48
      %v382 = vpop.permute.xlu0 %381
      %385 = vrot.lane.b32.xlu0 %v359, 64
      %v386 = vpop.permute.xlu0 %385
      %389 = vrot.lane.b32.xlu0 %v369, 80
      %v390 = vpop.permute.xlu0 %389
      %393 = vrot.lane.b32.xlu0 %v363, 96
      %v394 = vpop.permute.xlu0 %393
      %397 = vrot.lane.b32.xlu0 %v371, 112
      %v398 = vpop.permute.xlu0 %397
      %v400 = vsel %vm286, %v347, %v374
      %v401 = vsel %vm288, %v400, %v378
      %v402 = vsel %vm290, %v401, %v382
      %v403 = vsel %vm292, %v402, %v386
      %v404 = vsel %vm294, %v403, %v390
      %v405 = vsel %vm296, %v404, %v394
      %v406 = vsel %vm298, %v405, %v398
      %407 = vrot.lane.b32.xlu0 %v193, 126
      %v408 = vpop.permute.xlu0 %407
      %409 = vrot.lane.b32.xlu0 %v195, 126
      %v410 = vpop.permute.xlu0 %409
      %411 = vrot.lane.b32.xlu0 %v197, 126
      %v412 = vpop.permute.xlu0 %411
      %413 = vrot.lane.b32.xlu0 %v199, 126
      %v414 = vpop.permute.xlu0 %413
      %v419 = vrot.slane %v412, 4
      %v420 = vsel %vm202, %v419, %v408
      %v421 = vrot.slane %v408, 4
      %v422 = vsel %vm202, %v412, %v421
      %v424 = vunpack.c.l.s4 1983009808
      %v425 = vunpack.c.0.s8 %v424
      %v426 = vperm.slane %v420, %v425
      %v428 = vunpack.c.l.s4 1983009808
      %v429 = vunpack.c.0.s8 %v428
      %v430 = vperm.slane %v422, %v429
      %v431 = vrot.slane %v414, 4
      %v432 = vsel %vm202, %v431, %v410
      %v433 = vrot.slane %v410, 4
      %v434 = vsel %vm202, %v414, %v433
      %v436 = vunpack.c.l.s4 1983009808
      %v437 = vunpack.c.0.s8 %v436
      %v438 = vperm.slane %v432, %v437
      %v440 = vunpack.c.l.s4 1983009808
      %v441 = vunpack.c.0.s8 %v440
      %v442 = vperm.slane %v434, %v441
      %v443 = vrot.slane %v438, 4
      %v444 = vsel %vm202, %v443, %v426
      %v445 = vrot.slane %v426, 4
      %v446 = vsel %vm202, %v438, %v445
      %v448 = vunpack.c.l.s4 1934713408
      %v449 = vunpack.c.0.s8 %v448
      %v450 = vperm.slane %v444, %v449
      %v452 = vunpack.c.l.s4 1934713408
      %v453 = vunpack.c.0.s8 %v452
      %v454 = vperm.slane %v446, %v453
      %v455 = vrot.slane %v442, 4
      %v456 = vsel %vm202, %v455, %v430
      %v457 = vrot.slane %v430, 4
      %v458 = vsel %vm202, %v442, %v457
      %v460 = vunpack.c.l.s4 1934713408
      %v461 = vunpack.c.0.s8 %v460
      %v462 = vperm.slane %v456, %v461
      %v464 = vunpack.c.l.s4 1934713408
      %v465 = vunpack.c.0.s8 %v464
      %v466 = vperm.slane %v458, %v465
      %v467 = vrot.slane %v450, 4
      %v468 = vsel %vm202, 0.0, %v467
      %v469 = vrot.slane %v454, 4
      %v470 = vsel %vm202, 0.0, %v469
      %v471 = vrot.slane %v462, 4
      %v472 = vsel %vm202, 0.0, %v471
      %v473 = vrot.slane %v466, 4
      %v474 = vsel %vm202, 0.0, %v473
      %476 = vrot.lane.b32.xlu0 %v468, 16
      %v477 = vpop.permute.xlu0 %476
      %480 = vrot.lane.b32.xlu0 %v454, 32
      %v481 = vpop.permute.xlu0 %480
      %484 = vrot.lane.b32.xlu0 %v470, 48
      %v485 = vpop.permute.xlu0 %484
      %488 = vrot.lane.b32.xlu0 %v462, 64
      %v489 = vpop.permute.xlu0 %488
      %492 = vrot.lane.b32.xlu0 %v472, 80
      %v493 = vpop.permute.xlu0 %492
      %496 = vrot.lane.b32.xlu0 %v466, 96
      %v497 = vpop.permute.xlu0 %496
      %500 = vrot.lane.b32.xlu0 %v474, 112
      %v501 = vpop.permute.xlu0 %500
      %v503 = vsel %vm286, %v450, %v477
      %v504 = vsel %vm288, %v503, %v481
      %v505 = vsel %vm290, %v504, %v485
      %v506 = vsel %vm292, %v505, %v489
      %v507 = vsel %vm294, %v506, %v493
      %v508 = vsel %vm296, %v507, %v497
      %v509 = vsel %vm298, %v508, %v501
      %vm514 = vcmask 1046528
      %v515 = vrot.slane %v193, 1
      %v516 = vrot.slane %v194, 1
      %v517 = vsel %vm514, %v515, %v516
      %v518 = vrot.slane %v195, 1
      %v519 = vrot.slane %v196, 1
      %v520 = vsel %vm514, %v518, %v519
      %v521 = vrot.slane %v197, 1
      %v522 = vrot.slane %v198, 1
      %v523 = vsel %vm514, %v521, %v522
      %v524 = vrot.slane %v199, 1
      %v525 = vrot.slane %v200, 1
      %v526 = vsel %vm514, %v524, %v525
      %v531 = vrot.slane %v523, 4
      %v532 = vsel %vm202, %v531, %v517
      %v533 = vrot.slane %v517, 4
      %v534 = vsel %vm202, %v523, %v533
      %v536 = vunpack.c.l.s4 1983009808
      %v537 = vunpack.c.0.s8 %v536
      %v538 = vperm.slane %v532, %v537
      %v540 = vunpack.c.l.s4 1983009808
      %v541 = vunpack.c.0.s8 %v540
      %v542 = vperm.slane %v534, %v541
      %v543 = vrot.slane %v526, 4
      %v544 = vsel %vm202, %v543, %v520
      %v545 = vrot.slane %v520, 4
      %v546 = vsel %vm202, %v526, %v545
      %v548 = vunpack.c.l.s4 1983009808
      %v549 = vunpack.c.0.s8 %v548
      %v550 = vperm.slane %v544, %v549
      %v552 = vunpack.c.l.s4 1983009808
      %v553 = vunpack.c.0.s8 %v552
      %v554 = vperm.slane %v546, %v553
      %v555 = vrot.slane %v550, 4
      %v556 = vsel %vm202, %v555, %v538
      %v557 = vrot.slane %v538, 4
      %v558 = vsel %vm202, %v550, %v557
      %v560 = vunpack.c.l.s4 1934713408
      %v561 = vunpack.c.0.s8 %v560
      %v562 = vperm.slane %v556, %v561
      %v564 = vunpack.c.l.s4 1934713408
      %v565 = vunpack.c.0.s8 %v564
      %v566 = vperm.slane %v558, %v565
      %v567 = vrot.slane %v554, 4
      %v568 = vsel %vm202, %v567, %v542
      %v569 = vrot.slane %v542, 4
      %v570 = vsel %vm202, %v554, %v569
      %v572 = vunpack.c.l.s4 1934713408
      %v573 = vunpack.c.0.s8 %v572
      %v574 = vperm.slane %v568, %v573
      %v576 = vunpack.c.l.s4 1934713408
      %v577 = vunpack.c.0.s8 %v576
      %v578 = vperm.slane %v570, %v577
      %v579 = vrot.slane %v562, 4
      %v580 = vsel %vm202, 0.0, %v579
      %v581 = vrot.slane %v566, 4
      %v582 = vsel %vm202, 0.0, %v581
      %v583 = vrot.slane %v574, 4
      %v584 = vsel %vm202, 0.0, %v583
      %v585 = vrot.slane %v578, 4
      %v586 = vsel %vm202, 0.0, %v585
      %588 = vrot.lane.b32.xlu0 %v580, 16
      %v589 = vpop.permute.xlu0 %588
      %592 = vrot.lane.b32.xlu0 %v566, 32
      %v593 = vpop.permute.xlu0 %592
      %596 = vrot.lane.b32.xlu0 %v582, 48
      %v597 = vpop.permute.xlu0 %596
      %600 = vrot.lane.b32.xlu0 %v574, 64
      %v601 = vpop.permute.xlu0 %600
      %604 = vrot.lane.b32.xlu0 %v584, 80
      %v605 = vpop.permute.xlu0 %604
      %608 = vrot.lane.b32.xlu0 %v578, 96
      %v609 = vpop.permute.xlu0 %608
      %612 = vrot.lane.b32.xlu0 %v586, 112
      %v613 = vpop.permute.xlu0 %612
      %v615 = vsel %vm286, %v562, %v589
      %v616 = vsel %vm288, %v615, %v593
      %v617 = vsel %vm290, %v616, %v597
      %v618 = vsel %vm292, %v617, %v601
      %v619 = vsel %vm294, %v618, %v605
      %v620 = vsel %vm296, %v619, %v609
      %v621 = vsel %vm298, %v620, %v613
      %622 = vrot.lane.b32.xlu0 %v517, 127
      %v623 = vpop.permute.xlu0 %622
      %624 = vrot.lane.b32.xlu0 %v520, 127
      %v625 = vpop.permute.xlu0 %624
      %626 = vrot.lane.b32.xlu0 %v523, 127
      %v627 = vpop.permute.xlu0 %626
      %628 = vrot.lane.b32.xlu0 %v526, 127
      %v629 = vpop.permute.xlu0 %628
      %v634 = vrot.slane %v627, 4
      %v635 = vsel %vm202, %v634, %v623
      %v636 = vrot.slane %v623, 4
      %v637 = vsel %vm202, %v627, %v636
      %v639 = vunpack.c.l.s4 1983009808
      %v640 = vunpack.c.0.s8 %v639
      %v641 = vperm.slane %v635, %v640
      %v643 = vunpack.c.l.s4 1983009808
      %v644 = vunpack.c.0.s8 %v643
      %v645 = vperm.slane %v637, %v644
      %v646 = vrot.slane %v629, 4
      %v647 = vsel %vm202, %v646, %v625
      %v648 = vrot.slane %v625, 4
      %v649 = vsel %vm202, %v629, %v648
      %v651 = vunpack.c.l.s4 1983009808
      %v652 = vunpack.c.0.s8 %v651
      %v653 = vperm.slane %v647, %v652
      %v655 = vunpack.c.l.s4 1983009808
      %v656 = vunpack.c.0.s8 %v655
      %v657 = vperm.slane %v649, %v656
      %v658 = vrot.slane %v653, 4
      %v659 = vsel %vm202, %v658, %v641
      %v660 = vrot.slane %v641, 4
      %v661 = vsel %vm202, %v653, %v660
      %v663 = vunpack.c.l.s4 1934713408
      %v664 = vunpack.c.0.s8 %v663
      %v665 = vperm.slane %v659, %v664
      %v667 = vunpack.c.l.s4 1934713408
      %v668 = vunpack.c.0.s8 %v667
      %v669 = vperm.slane %v661, %v668
      %v670 = vrot.slane %v657, 4
      %v671 = vsel %vm202, %v670, %v645
      %v672 = vrot.slane %v645, 4
      %v673 = vsel %vm202, %v657, %v672
      %v675 = vunpack.c.l.s4 1934713408
      %v676 = vunpack.c.0.s8 %v675
      %v677 = vperm.slane %v671, %v676
      %v679 = vunpack.c.l.s4 1934713408
      %v680 = vunpack.c.0.s8 %v679
      %v681 = vperm.slane %v673, %v680
      %v682 = vrot.slane %v665, 4
      %v683 = vsel %vm202, 0.0, %v682
      %v684 = vrot.slane %v669, 4
      %v685 = vsel %vm202, 0.0, %v684
      %v686 = vrot.slane %v677, 4
      %v687 = vsel %vm202, 0.0, %v686
      %v688 = vrot.slane %v681, 4
      %v689 = vsel %vm202, 0.0, %v688
      %691 = vrot.lane.b32.xlu0 %v683, 16
      %v692 = vpop.permute.xlu0 %691
      %695 = vrot.lane.b32.xlu0 %v669, 32
      %v696 = vpop.permute.xlu0 %695
      %699 = vrot.lane.b32.xlu0 %v685, 48
      %v700 = vpop.permute.xlu0 %699
      %703 = vrot.lane.b32.xlu0 %v677, 64
      %v704 = vpop.permute.xlu0 %703
      %707 = vrot.lane.b32.xlu0 %v687, 80
      %v708 = vpop.permute.xlu0 %707
      %711 = vrot.lane.b32.xlu0 %v681, 96
      %v712 = vpop.permute.xlu0 %711
      %715 = vrot.lane.b32.xlu0 %v689, 112
      %v716 = vpop.permute.xlu0 %715
      %v718 = vsel %vm286, %v665, %v692
      %v719 = vsel %vm288, %v718, %v696
      %v720 = vsel %vm290, %v719, %v700
      %v721 = vsel %vm292, %v720, %v704
      %v722 = vsel %vm294, %v721, %v708
      %v723 = vsel %vm296, %v722, %v712
      %v724 = vsel %vm298, %v723, %v716
      %725 = vrot.lane.b32.xlu0 %v517, 126
      %v726 = vpop.permute.xlu0 %725
      %727 = vrot.lane.b32.xlu0 %v520, 126
      %v728 = vpop.permute.xlu0 %727
      %729 = vrot.lane.b32.xlu0 %v523, 126
      %v730 = vpop.permute.xlu0 %729
      %731 = vrot.lane.b32.xlu0 %v526, 126
      %v732 = vpop.permute.xlu0 %731
      %v737 = vrot.slane %v730, 4
      %v738 = vsel %vm202, %v737, %v726
      %v739 = vrot.slane %v726, 4
      %v740 = vsel %vm202, %v730, %v739
      %v742 = vunpack.c.l.s4 1983009808
      %v743 = vunpack.c.0.s8 %v742
      %v744 = vperm.slane %v738, %v743
      %v746 = vunpack.c.l.s4 1983009808
      %v747 = vunpack.c.0.s8 %v746
      %v748 = vperm.slane %v740, %v747
      %v749 = vrot.slane %v732, 4
      %v750 = vsel %vm202, %v749, %v728
      %v751 = vrot.slane %v728, 4
      %v752 = vsel %vm202, %v732, %v751
      %v754 = vunpack.c.l.s4 1983009808
      %v755 = vunpack.c.0.s8 %v754
      %v756 = vperm.slane %v750, %v755
      %v758 = vunpack.c.l.s4 1983009808
      %v759 = vunpack.c.0.s8 %v758
      %v760 = vperm.slane %v752, %v759
      %v761 = vrot.slane %v756, 4
      %v762 = vsel %vm202, %v761, %v744
      %v763 = vrot.slane %v744, 4
      %v764 = vsel %vm202, %v756, %v763
      %v766 = vunpack.c.l.s4 1934713408
      %v767 = vunpack.c.0.s8 %v766
      %v768 = vperm.slane %v762, %v767
      %v770 = vunpack.c.l.s4 1934713408
      %v771 = vunpack.c.0.s8 %v770
      %v772 = vperm.slane %v764, %v771
      %v773 = vrot.slane %v760, 4
      %v774 = vsel %vm202, %v773, %v748
      %v775 = vrot.slane %v748, 4
      %v776 = vsel %vm202, %v760, %v775
      %v778 = vunpack.c.l.s4 1934713408
      %v779 = vunpack.c.0.s8 %v778
      %v780 = vperm.slane %v774, %v779
      %v782 = vunpack.c.l.s4 1934713408
      %v783 = vunpack.c.0.s8 %v782
      %v784 = vperm.slane %v776, %v783
      %v785 = vrot.slane %v768, 4
      %v786 = vsel %vm202, 0.0, %v785
      %v787 = vrot.slane %v772, 4
      %v788 = vsel %vm202, 0.0, %v787
      %v789 = vrot.slane %v780, 4
      %v790 = vsel %vm202, 0.0, %v789
      %v791 = vrot.slane %v784, 4
      %v792 = vsel %vm202, 0.0, %v791
      %794 = vrot.lane.b32.xlu0 %v786, 16
      %v795 = vpop.permute.xlu0 %794
      %798 = vrot.lane.b32.xlu0 %v772, 32
      %v799 = vpop.permute.xlu0 %798
      %802 = vrot.lane.b32.xlu0 %v788, 48
      %v803 = vpop.permute.xlu0 %802
      %806 = vrot.lane.b32.xlu0 %v780, 64
      %v807 = vpop.permute.xlu0 %806
      %810 = vrot.lane.b32.xlu0 %v790, 80
      %v811 = vpop.permute.xlu0 %810
      %814 = vrot.lane.b32.xlu0 %v784, 96
      %v815 = vpop.permute.xlu0 %814
      %818 = vrot.lane.b32.xlu0 %v792, 112
      %v819 = vpop.permute.xlu0 %818
      %v821 = vsel %vm286, %v768, %v795
      %v822 = vsel %vm288, %v821, %v799
      %v823 = vsel %vm290, %v822, %v803
      %v824 = vsel %vm292, %v823, %v807
      %v825 = vsel %vm294, %v824, %v811
      %v826 = vsel %vm296, %v825, %v815
      %v827 = vsel %vm298, %v826, %v819
      %vm828 = vcmask 1045504
      %v829 = vrot.slane %v193, 2
      %v830 = vrot.slane %v194, 2
      %v831 = vsel %vm828, %v829, %v830
      %v832 = vrot.slane %v195, 2
      %v833 = vrot.slane %v196, 2
      %v834 = vsel %vm828, %v832, %v833
      %v835 = vrot.slane %v197, 2
      %v836 = vrot.slane %v198, 2
      %v837 = vsel %vm828, %v835, %v836
      %v838 = vrot.slane %v199, 2
      %v839 = vrot.slane %v200, 2
      %v840 = vsel %vm828, %v838, %v839
      %v845 = vrot.slane %v837, 4
      %v846 = vsel %vm202, %v845, %v831
      %v847 = vrot.slane %v831, 4
      %v848 = vsel %vm202, %v837, %v847
      %v850 = vunpack.c.l.s4 1983009808
      %v851 = vunpack.c.0.s8 %v850
      %v852 = vperm.slane %v846, %v851
      %v854 = vunpack.c.l.s4 1983009808
      %v855 = vunpack.c.0.s8 %v854
      %v856 = vperm.slane %v848, %v855
      %v857 = vrot.slane %v840, 4
      %v858 = vsel %vm202, %v857, %v834
      %v859 = vrot.slane %v834, 4
      %v860 = vsel %vm202, %v840, %v859
      %v862 = vunpack.c.l.s4 1983009808
      %v863 = vunpack.c.0.s8 %v862
      %v864 = vperm.slane %v858, %v863
      %v866 = vunpack.c.l.s4 1983009808
      %v867 = vunpack.c.0.s8 %v866
      %v868 = vperm.slane %v860, %v867
      %v869 = vrot.slane %v864, 4
      %v870 = vsel %vm202, %v869, %v852
      %v871 = vrot.slane %v852, 4
      %v872 = vsel %vm202, %v864, %v871
      %v874 = vunpack.c.l.s4 1934713408
      %v875 = vunpack.c.0.s8 %v874
      %v876 = vperm.slane %v870, %v875
      %v878 = vunpack.c.l.s4 1934713408
      %v879 = vunpack.c.0.s8 %v878
      %v880 = vperm.slane %v872, %v879
      %v881 = vrot.slane %v868, 4
      %v882 = vsel %vm202, %v881, %v856
      %v883 = vrot.slane %v856, 4
      %v884 = vsel %vm202, %v868, %v883
      %v886 = vunpack.c.l.s4 1934713408
      %v887 = vunpack.c.0.s8 %v886
      %v888 = vperm.slane %v882, %v887
      %v890 = vunpack.c.l.s4 1934713408
      %v891 = vunpack.c.0.s8 %v890
      %v892 = vperm.slane %v884, %v891
      %v893 = vrot.slane %v876, 4
      %v894 = vsel %vm202, 0.0, %v893
      %v895 = vrot.slane %v880, 4
      %v896 = vsel %vm202, 0.0, %v895
      %v897 = vrot.slane %v888, 4
      %v898 = vsel %vm202, 0.0, %v897
      %v899 = vrot.slane %v892, 4
      %v900 = vsel %vm202, 0.0, %v899
      %902 = vrot.lane.b32.xlu0 %v894, 16
      %v903 = vpop.permute.xlu0 %902
      %906 = vrot.lane.b32.xlu0 %v880, 32
      %v907 = vpop.permute.xlu0 %906
      %910 = vrot.lane.b32.xlu0 %v896, 48
      %v911 = vpop.permute.xlu0 %910
      %914 = vrot.lane.b32.xlu0 %v888, 64
      %v915 = vpop.permute.xlu0 %914
      %918 = vrot.lane.b32.xlu0 %v898, 80
      %v919 = vpop.permute.xlu0 %918
      %922 = vrot.lane.b32.xlu0 %v892, 96
      %v923 = vpop.permute.xlu0 %922
      %926 = vrot.lane.b32.xlu0 %v900, 112
      %v927 = vpop.permute.xlu0 %926
      %v929 = vsel %vm286, %v876, %v903
      %v930 = vsel %vm288, %v929, %v907
      %v931 = vsel %vm290, %v930, %v911
      %v932 = vsel %vm292, %v931, %v915
      %v933 = vsel %vm294, %v932, %v919
      %v934 = vsel %vm296, %v933, %v923
      %v935 = vsel %vm298, %v934, %v927
      %936 = vrot.lane.b32.xlu0 %v831, 127
      %v937 = vpop.permute.xlu0 %936
      %938 = vrot.lane.b32.xlu0 %v834, 127
      %v939 = vpop.permute.xlu0 %938
      %940 = vrot.lane.b32.xlu0 %v837, 127
      %v941 = vpop.permute.xlu0 %940
      %942 = vrot.lane.b32.xlu0 %v840, 127
      %v943 = vpop.permute.xlu0 %942
      %v948 = vrot.slane %v941, 4
      %v949 = vsel %vm202, %v948, %v937
      %v950 = vrot.slane %v937, 4
      %v951 = vsel %vm202, %v941, %v950
      %v953 = vunpack.c.l.s4 1983009808
      %v954 = vunpack.c.0.s8 %v953
      %v955 = vperm.slane %v949, %v954
      %v957 = vunpack.c.l.s4 1983009808
      %v958 = vunpack.c.0.s8 %v957
      %v959 = vperm.slane %v951, %v958
      %v960 = vrot.slane %v943, 4
      %v961 = vsel %vm202, %v960, %v939
      %v962 = vrot.slane %v939, 4
      %v963 = vsel %vm202, %v943, %v962
      %v965 = vunpack.c.l.s4 1983009808
      %v966 = vunpack.c.0.s8 %v965
      %v967 = vperm.slane %v961, %v966
      %v969 = vunpack.c.l.s4 1983009808
      %v970 = vunpack.c.0.s8 %v969
      %v971 = vperm.slane %v963, %v970
      %v972 = vrot.slane %v967, 4
      %v973 = vsel %vm202, %v972, %v955
      %v974 = vrot.slane %v955, 4
      %v975 = vsel %vm202, %v967, %v974
      %v977 = vunpack.c.l.s4 1934713408
      %v978 = vunpack.c.0.s8 %v977
      %v979 = vperm.slane %v973, %v978
      %v981 = vunpack.c.l.s4 1934713408
      %v982 = vunpack.c.0.s8 %v981
      %v983 = vperm.slane %v975, %v982
      %v984 = vrot.slane %v971, 4
      %v985 = vsel %vm202, %v984, %v959
      %v986 = vrot.slane %v959, 4
      %v987 = vsel %vm202, %v971, %v986
      %v989 = vunpack.c.l.s4 1934713408
      %v990 = vunpack.c.0.s8 %v989
      %v991 = vperm.slane %v985, %v990
      %v993 = vunpack.c.l.s4 1934713408
      %v994 = vunpack.c.0.s8 %v993
      %v995 = vperm.slane %v987, %v994
      %v996 = vrot.slane %v979, 4
      %v997 = vsel %vm202, 0.0, %v996
      %v998 = vrot.slane %v983, 4
      %v999 = vsel %vm202, 0.0, %v998
      %v1000 = vrot.slane %v991, 4
      %v1001 = vsel %vm202, 0.0, %v1000
      %v1002 = vrot.slane %v995, 4
      %v1003 = vsel %vm202, 0.0, %v1002
      %1005 = vrot.lane.b32.xlu0 %v997, 16
      %v1006 = vpop.permute.xlu0 %1005
      %1009 = vrot.lane.b32.xlu0 %v983, 32
      %v1010 = vpop.permute.xlu0 %1009
      %1013 = vrot.lane.b32.xlu0 %v999, 48
      %v1014 = vpop.permute.xlu0 %1013
      %1017 = vrot.lane.b32.xlu0 %v991, 64
      %v1018 = vpop.permute.xlu0 %1017
      %1021 = vrot.lane.b32.xlu0 %v1001, 80
      %v1022 = vpop.permute.xlu0 %1021
      %1025 = vrot.lane.b32.xlu0 %v995, 96
      %v1026 = vpop.permute.xlu0 %1025
      %1029 = vrot.lane.b32.xlu0 %v1003, 112
      %v1030 = vpop.permute.xlu0 %1029
      %v1032 = vsel %vm286, %v979, %v1006
      %v1033 = vsel %vm288, %v1032, %v1010
      %v1034 = vsel %vm290, %v1033, %v1014
      %v1035 = vsel %vm292, %v1034, %v1018
      %v1036 = vsel %vm294, %v1035, %v1022
      %v1037 = vsel %vm296, %v1036, %v1026
      %v1038 = vsel %vm298, %v1037, %v1030
      %1039 = vrot.lane.b32.xlu0 %v831, 126
      %v1040 = vpop.permute.xlu0 %1039
      %1041 = vrot.lane.b32.xlu0 %v834, 126
      %v1042 = vpop.permute.xlu0 %1041
      %1043 = vrot.lane.b32.xlu0 %v837, 126
      %v1044 = vpop.permute.xlu0 %1043
      %1045 = vrot.lane.b32.xlu0 %v840, 126
      %v1046 = vpop.permute.xlu0 %1045
      %v1051 = vrot.slane %v1044, 4
      %v1052 = vsel %vm202, %v1051, %v1040
      %v1053 = vrot.slane %v1040, 4
      %v1054 = vsel %vm202, %v1044, %v1053
      %v1056 = vunpack.c.l.s4 1983009808
      %v1057 = vunpack.c.0.s8 %v1056
      %v1058 = vperm.slane %v1052, %v1057
      %v1060 = vunpack.c.l.s4 1983009808
      %v1061 = vunpack.c.0.s8 %v1060
      %v1062 = vperm.slane %v1054, %v1061
      %v1063 = vrot.slane %v1046, 4
      %v1064 = vsel %vm202, %v1063, %v1042
      %v1065 = vrot.slane %v1042, 4
      %v1066 = vsel %vm202, %v1046, %v1065
      %v1068 = vunpack.c.l.s4 1983009808
      %v1069 = vunpack.c.0.s8 %v1068
      %v1070 = vperm.slane %v1064, %v1069
      %v1072 = vunpack.c.l.s4 1983009808
      %v1073 = vunpack.c.0.s8 %v1072
      %v1074 = vperm.slane %v1066, %v1073
      %v1075 = vrot.slane %v1070, 4
      %v1076 = vsel %vm202, %v1075, %v1058
      %v1077 = vrot.slane %v1058, 4
      %v1078 = vsel %vm202, %v1070, %v1077
      %v1080 = vunpack.c.l.s4 1934713408
      %v1081 = vunpack.c.0.s8 %v1080
      %v1082 = vperm.slane %v1076, %v1081
      %v1084 = vunpack.c.l.s4 1934713408
      %v1085 = vunpack.c.0.s8 %v1084
      %v1086 = vperm.slane %v1078, %v1085
      %v1087 = vrot.slane %v1074, 4
      %v1088 = vsel %vm202, %v1087, %v1062
      %v1089 = vrot.slane %v1062, 4
      %v1090 = vsel %vm202, %v1074, %v1089
      %v1092 = vunpack.c.l.s4 1934713408
      %v1093 = vunpack.c.0.s8 %v1092
      %v1094 = vperm.slane %v1088, %v1093
      %v1096 = vunpack.c.l.s4 1934713408
      %v1097 = vunpack.c.0.s8 %v1096
      %v1098 = vperm.slane %v1090, %v1097
      %v1099 = vrot.slane %v1082, 4
      %v1100 = vsel %vm202, 0.0, %v1099
      %v1101 = vrot.slane %v1086, 4
      %v1102 = vsel %vm202, 0.0, %v1101
      %v1103 = vrot.slane %v1094, 4
      %v1104 = vsel %vm202, 0.0, %v1103
      %v1105 = vrot.slane %v1098, 4
      %v1106 = vsel %vm202, 0.0, %v1105
      %1108 = vrot.lane.b32.xlu0 %v1100, 16
      %v1109 = vpop.permute.xlu0 %1108
      %1112 = vrot.lane.b32.xlu0 %v1086, 32
      %v1113 = vpop.permute.xlu0 %1112
      %1116 = vrot.lane.b32.xlu0 %v1102, 48
      %v1117 = vpop.permute.xlu0 %1116
      %1120 = vrot.lane.b32.xlu0 %v1094, 64
      %v1121 = vpop.permute.xlu0 %1120
      %1124 = vrot.lane.b32.xlu0 %v1104, 80
      %v1125 = vpop.permute.xlu0 %1124
      %1128 = vrot.lane.b32.xlu0 %v1098, 96
      %v1129 = vpop.permute.xlu0 %1128
      %1132 = vrot.lane.b32.xlu0 %v1106, 112
      %v1133 = vpop.permute.xlu0 %1132
      %v1135 = vsel %vm286, %v1082, %v1109
      %v1136 = vsel %vm288, %v1135, %v1113
      %v1137 = vsel %vm290, %v1136, %v1117
      %v1138 = vsel %vm292, %v1137, %v1121
      %v1139 = vsel %vm294, %v1138, %v1125
      %v1140 = vsel %vm296, %v1139, %v1129
      %v1141 = vsel %vm298, %v1140, %v1133
      %v1143 = vrot.slane %v406, 4
      %v1146 = vrot.slane %v621, 4
      %v1149 = vrot.slane %v827, 4
      %v1152 = vrot.slane %v1038, 4
      %vm1154 = vcmask 1043456
      %v1155 = vsel %vm1154, %v299, %v1143
      %v1156 = vsel %vm1154, %v509, %v1146
      %v1157 = vsel %vm1154, %v724, %v1149
      %v1158 = vsel %vm1154, %v935, %v1152
      %v1159 = vld [vmem:[%s1] sm:$0xff]
      %v1160 = vld [vmem:[%s2] sm:$0xff]
      %1162 = vset.pattern.permute.xlu0 0
      %1163 = vperm.xlu0 %1162, %v1160
      %v1164 = vpop.permute.xlu0 %1163
      %vm1166 = vcmask 293888
      %v1168 = vsel %vm1166, %v1159, 0
      %v1171 = vsel %vm1154, %v1141, 0
      %1173 = vmatpush.msra.mxu0 0.0
      %1174 = vmatpush.msra.mxu0 0.0
      %1175 = vmatpush.msra.mxu0 0.0
      %1176 = vmatpush.msra.mxu0 0.0
      %1177 = vmatpush.msra.mxu0 0.0
      %1178 = vmatpush.msra.mxu0 0.0
      %1179 = vmatpush.msra.mxu0 0.0
      %1180 = vmatpush.msra.mxu0 0.0
      %1181 = vmatpush.msra.mxu0 0.0
      %1182 = vmatpush.msra.mxu0 0.0
      %1183 = vmatpush.msra.mxu0 0.0
      %1184 = vmatpush.msra.mxu0 %v1171
      %1185 = vmatpush.msra.mxu0 %v1158
      %1186 = vmatpush.msra.mxu0 %v1157
      %1187 = vmatpush.msra.mxu0 %v1156
      %1188 = vmatpush.msra.mxu0 %v1155
      %1189 = vmatmul.f32.gmra.mxu0 %v1168
      %v1190 = vpop.f32.mrf.mxu0
      %v1191 = vadd.f32 %v1164, %v1190
      %1192 = vdwg.mxu0
      %1193 = vst [vmem:[%s190] sm:$0xff] %v1191
      %p1194 = scmp.lt.s32.totalorder %s18, 1
      %s1195 = scalar_select %p1194, %s18, 1
      %p1196 = scmp.lt.s32.totalorder %s19, 1
      %s1197 = scalar_select %p1196, %s19, 1
      %s1198 = smul.addr %s1195, 2
      %s1199 = sadd.s32 %s1197, %s1198
      %s1200 = smul.addr %s1199, 8
      %s1201 = scalar_lea.vmem %s3, %s1200
      // Predicated region
      $region33: #{residual_conv3x3.1} parent=31 // pred_check
        %p1202 = pneg %p114
      $region34: #{residual_conv3x3.1} parent=31 // pred_check_branch
        %1204 = sbr.rel (%p1202) target = $region36
      $region35: #{residual_conv3x3.1} parent=31 // pred_region
        _
      $region36: #{residual_conv3x3.1} parent=31 // pred_fallthru
        _
    $region32: #{residual_conv3x3.1} parent=5 // pred_fallthru
      _
    %p1205 = scmp.le.s32.totalorder 2, %s9
    // Predicated region
    $region37: #{residual_conv3x3.1} parent=5 // pred_check
      %p1206 = pneg %p1205
    $region38: #{residual_conv3x3.1} parent=5 // pred_check_branch
      %1208 = sbr.rel (%p1206) target = $region40
    $region39: #{residual_conv3x3.1} parent=5 // pred_region
      %s1209 = ssub.s32 %s9, 2
      // Predicated region
      $region41: #{residual_conv3x3.1} parent=39 // pred_check
        %p1210 = pneg %p120
      $region42: #{residual_conv3x3.1} parent=39 // pred_check_branch
        %1212 = sbr.rel (%p1210) target = $region44
      $region43: #{residual_conv3x3.1} parent=39 // pred_region
        %p1213 = scmp.lt.s32.totalorder %s20, 1
        %s1214 = scalar_select %p1213, %s20, 1
        %p1215 = scmp.lt.s32.totalorder %s21, 1
        %s1216 = scalar_select %p1215, %s21, 1
        %s1217 = smul.addr %s1214, 2
        %s1218 = sadd.s32 %s1216, %s1217
        %s1219 = smul.addr %s1218, 8
        %s1220 = scalar_lea.vmem %s3, %s1219
      $region44: #{residual_conv3x3.1} parent=39 // pred_fallthru
        _
    $region40: #{residual_conv3x3.1} parent=5 // pred_fallthru
      _
  $region6: #{residual_conv3x3.1} parent=0 // loop_footer
    %s13 = sadd.s32 1, %s9
  $region7: #{residual_conv3x3.1} parent=0 // loop_footer_branch
    %8 = sbr.rel target = $region3
  $region8: #{residual_conv3x3.1} parent=0 // loop_exit
    _

</llo_original>
